<compile_context>
chip_gen: v7x
topology: tpu7x:2x2x1
jax: 0.10.0
libtpu: 0.0.40
codegen_flags: <defaults>
</compile_context>

<pallas_src>
import functools

import jax
import jax.numpy as jnp
from jax.experimental import pallas as pl
from jax.experimental.pallas import tpu as pltpu


def _fused_resnet_kernel(y0_ref, w_ref, b_ref, o_ref, *, num_unroll):
    """One grid step = `num_unroll` residual blocks applied to the resident activation."""
    i = pl.program_id(0)

    # Load the initial activation into the resident f32 output block once.
    @pl.when(i == 0)
    def _init():
        o_ref[...] = y0_ref[...].astype(jnp.float32)

    y = o_ref[...]                       # (B, H) f32, resident across the whole grid
    base = i * num_unroll                # first block handled by this grid step
    # Static Python unroll: `u` stays a Python int, so w_ref[u] is a zero-cost
    # static view of the (U, H, H) weight slab DMA'd for this step.
    for u in range(num_unroll):
        w = w_ref[u]                                     # (H, H) bf16
        b = b_ref[pl.ds(base + u, 1), :]                 # (1, H) f32, resident bias stack
        z = jnp.dot(y.astype(w.dtype), w,
                    preferred_element_type=jnp.float32)  # MXU bf16 x bf16 -> f32 acc
        y = y + (z + b)                                  # residual + bias in f32 on the VPU
    o_ref[...] = y                       # resident block; HBM writeback happens once at grid end


def resnet_forward(y0, w_stack, b_stack, *,
                   max_unroll=4, weight_tile_bytes=2 * 1024 * 1024):
    """Fused ResNet.forward: y = y + Linear_i(y) for every stacked block i."""
    B, H = y0.shape
    N = w_stack.shape[0]
    w_itemsize = jnp.dtype(w_stack.dtype).itemsize

    # Blocks unrolled per grid step: bounded by a per-step weight-tile byte
    # budget (keeps double-buffered weights VMEM-safe, tightest on v7x) and a
    # small max unroll (diminishing returns past amortizing step overhead).
    budget_blocks = max(1, weight_tile_bytes // (H * H * w_itemsize))
    U = int(max(1, min(N, max_unroll, budget_blocks)))
    n_steps = int(pl.cdiv(N, U))
    Npad = n_steps * U
    if Npad != N:
        # Zero block => y + (y @ 0 + 0) = y: exact identity, so padding is safe.
        w_stack = jnp.concatenate(
            [w_stack, jnp.zeros((Npad - N, H, H), w_stack.dtype)], axis=0)
        b_stack = jnp.concatenate(
            [b_stack, jnp.zeros((Npad - N, H), b_stack.dtype)], axis=0)

    # Explicit VMEM budget (double buffers for every spec'd array).
    vmem_bytes = (
        2 * U * H * H * w_itemsize                     # pipelined weight slabs
        + 2 * Npad * H * 4                             # resident f32 bias stack
        + 2 * B * H * jnp.dtype(y0.dtype).itemsize     # y0 (constant block)
        + 2 * B * H * 4                                # f32 output accumulator block
    )
    cp_kwargs = dict(dimension_semantics=("arbitrary",))  # sequential block recurrence
    if vmem_bytes > 12 * 1024 * 1024:
        # Raise the scoped VMEM limit only when the default (16 MiB on v5e,
        # 32 MiB on v6e/v7x) would force degraded buffering.
        cp_kwargs["vmem_limit_bytes"] = int(vmem_bytes + 4 * 1024 * 1024)

    out = pl.pallas_call(
        functools.partial(_fused_resnet_kernel, num_unroll=U),
        out_shape=jax.ShapeDtypeStruct((B, H), jnp.float32),
        grid_spec=pltpu.PrefetchScalarGridSpec(
            num_scalar_prefetch=0,
            grid=(n_steps,),
            in_specs=[
                # y0: constant block index -> fetched once, stays in VMEM.
                pl.BlockSpec((B, H), lambda i: (0, 0)),
                # Weights: (U, H, H) slab pipelined along the block axis; the
                # next step's slab is DMA'd while this step runs on the MXU.
                pl.BlockSpec((U, H, H), lambda i: (i, 0, 0)),
                # Bias: whole stack resident (constant index) -> no per-step DMAs.
                pl.BlockSpec((Npad, H), lambda i: (0, 0)),
            ],
            # Constant index_map -> output block resident across the grid and
            # used directly as the f32 accumulator; single HBM writeback.
            out_specs=pl.BlockSpec((B, H), lambda i: (0, 0)),
        ),
        compiler_params=pltpu.CompilerParams(**cp_kwargs),
    )(y0, w_stack, b_stack)
    return out.astype(y0.dtype)
    # TODO(synk): for H >= ~2048, tile W as (tk, tn) with grid=(n_steps, H//tn, H//tk)
    # (reduction axis last, "arbitrary") so per-buffer weight VMEM stays ~128-256 KiB
    # (mandatory on v7x's 64 MiB VMEM); for large batch (B >= ~256) add a leading
    # "parallel" batch axis to shard across v7x's two TensorCores, and consider
    # pipeline_mode=pl.Buffered(3) on the weight spec when per-step compute is short.


def init_params(key, num_blocks, hidden):
    """Deterministic stacked Linear(hidden, hidden) parameters.

    Weights stored in bf16 (MXU inputs), biases kept in f32 (VPU epilogue).
    """
    kw, kb = jax.random.split(key)
    scale = 1.0 / jnp.sqrt(jnp.float32(hidden))
    w = jax.random.uniform(kw, (num_blocks, hidden, hidden), jnp.float32, -scale, scale)
    b = jax.random.uniform(kb, (num_blocks, hidden), jnp.float32, -scale, scale)
    return w.astype(jnp.bfloat16), b


def resnet_reference(y0, w_stack, b_stack):
    """Pure-JAX reference of the same forward pass (bf16 MXU inputs, f32 acc)."""
    y = y0.astype(jnp.float32)
    for i in range(w_stack.shape[0]):
        yb = y.astype(jnp.bfloat16).astype(jnp.float32)
        wf = w_stack[i].astype(jnp.float32)
        z = jnp.dot(yb, wf, precision=jax.lax.Precision.HIGHEST) + b_stack[i]
        y = y + z
    return y.astype(y0.dtype)


if __name__ == "__main__":
    key = jax.random.PRNGKey(0)
    batch, hidden, num_blocks = 8, 128, 6   # N=6 exercises zero-padding to U=4 multiples

    kx, kp = jax.random.split(key)
    y0 = jax.random.normal(kx, (batch, hidden), jnp.float32)
    w_stack, b_stack = init_params(kp, num_blocks, hidden)

    out = jax.jit(resnet_forward)(y0, w_stack, b_stack)
    out = jax.block_until_ready(out)

    ref = resnet_reference(y0, w_stack, b_stack)
    assert out.shape == (batch, hidden)
    assert out.dtype == y0.dtype
    assert jnp.allclose(out, ref, atol=2e-3, rtol=2e-3), (
        float(jnp.max(jnp.abs(out - ref))))

    print("KERNEL_OK")
</pallas_src>

<mosaic_0001>
module attributes {stable_mosaic.version = 11 : i64} {
  func.func @_fused_resnet_kernel(%arg0: i32, %arg1: memref<8x128xf32, #tpu.memory_space<vmem>>, %arg2: memref<4x128x128xbf16, #tpu.memory_space<vmem>>, %arg3: memref<8x128xf32, #tpu.memory_space<vmem>>, %arg4: memref<8x128xf32, #tpu.memory_space<vmem>>) attributes {dimension_semantics = [#tpu.dimension_semantics<arbitrary>], iteration_bounds = array<i64: 2>, scalar_prefetch = 0 : i64, scratch_operands = 0 : i64, tpu.core_type = #tpu.core_type<tc>, window_params = [{pipeline_mode = #tpu.pipeline_mode<synchronous>, transform_indices = @transform_0, window_bounds = array<i64: 8, 128>}, {transform_indices = @transform_1, window_bounds = array<i64: 4, 128, 128>}, {pipeline_mode = #tpu.pipeline_mode<synchronous>, transform_indices = @transform_2, window_bounds = array<i64: 8, 128>}, {pipeline_mode = #tpu.pipeline_mode<synchronous>, transform_indices = @transform_3, window_bounds = array<i64: 8, 128>}]} {
    %c0_i32 = arith.constant 0 : i32
    %0 = arith.cmpi eq, %arg0, %c0_i32 : i32
    %1 = arith.extui %0 : i1 to i32
    %c0_i32_0 = arith.constant 0 : i32
    %2 = arith.cmpi ne, %1, %c0_i32_0 : i32
    scf.if %2 {
      %c0_21 = arith.constant 0 : index
      %c0_22 = arith.constant 0 : index
      %46 = vector.load %arg1[%c0_21, %c0_22] : memref<8x128xf32, #tpu.memory_space<vmem>>, vector<8x128xf32>
      %c0_23 = arith.constant 0 : index
      %c0_24 = arith.constant 0 : index
      %47 = vector.load %arg4[%c0_23, %c0_24] : memref<8x128xf32, #tpu.memory_space<vmem>>, vector<8x128xf32>
      tpu.vector_store %arg4[%c0_23, %c0_24], %46 {strides = array<i32>} : memref<8x128xf32, #tpu.memory_space<vmem>>, vector<8x128xf32>,
    } else {
    }
    %c0 = arith.constant 0 : index
    %c0_1 = arith.constant 0 : index
    %3 = vector.load %arg4[%c0, %c0_1] : memref<8x128xf32, #tpu.memory_space<vmem>>, vector<8x128xf32>
    %c4_i32 = arith.constant 4 : i32
    %4 = arith.muli %arg0, %c4_i32 : i32
    %c0_2 = arith.constant 0 : index
    %c0_3 = arith.constant 0 : index
    %c0_4 = arith.constant 0 : index
    %5 = vector.load %arg2[%c0_2, %c0_3, %c0_4] : memref<4x128x128xbf16, #tpu.memory_space<vmem>>, vector<1x128x128xbf16>
    %6 = vector.shape_cast %5 : vector<1x128x128xbf16> to vector<128x128xbf16>
    %c0_i32_5 = arith.constant 0 : i32
    %7 = arith.addi %4, %c0_i32_5 : i32
    %8 = arith.index_cast %7 : i32 to index
    %c0_6 = arith.constant 0 : index
    %9 = vector.load %arg3[%8, %c0_6] : memref<8x128xf32, #tpu.memory_space<vmem>>, vector<1x128xf32>
    %10 = arith.truncf %3 : vector<8x128xf32> to vector<8x128xbf16>
    %cst = arith.constant dense<0.000000e+00> : vector<8x128xf32>
    %11 = tpu.matmul %10, %6, %cst {dimension_numbers = #tpu.dot_dimension_numbers<[1], [0], [0], [1], [0, 0, 1, 1], [], []>} : vector<8x128xbf16>, vector<128x128xbf16>, vector<8x128xf32> -> vector<8x128xf32>
    %12 = vector.broadcast %9 : vector<1x128xf32> to vector<8x128xf32>
    %13 = arith.addf %11, %12 : vector<8x128xf32>
    %14 = arith.addf %3, %13 : vector<8x128xf32>
    %c1 = arith.constant 1 : index
    %c0_7 = arith.constant 0 : index
    %c0_8 = arith.constant 0 : index
    %15 = vector.load %arg2[%c1, %c0_7, %c0_8] : memref<4x128x128xbf16, #tpu.memory_space<vmem>>, vector<1x128x128xbf16>
    %16 = vector.shape_cast %15 : vector<1x128x128xbf16> to vector<128x128xbf16>
    %c1_i32 = arith.constant 1 : i32
    %17 = arith.addi %4, %c1_i32 : i32
    %18 = arith.index_cast %17 : i32 to index
    %c0_9 = arith.constant 0 : index
    %19 = vector.load %arg3[%18, %c0_9] : memref<8x128xf32, #tpu.memory_space<vmem>>, vector<1x128xf32>
    %20 = arith.truncf %14 : vector<8x128xf32> to vector<8x128xbf16>
    %cst_10 = arith.constant dense<0.000000e+00> : vector<8x128xf32>
    %21 = tpu.matmul %20, %16, %cst_10 {dimension_numbers = #tpu.dot_dimension_numbers<[1], [0], [0], [1], [0, 0, 1, 1], [], []>} : vector<8x128xbf16>, vector<128x128xbf16>, vector<8x128xf32> -> vector<8x128xf32>
    %22 = vector.broadcast %19 : vector<1x128xf32> to vector<8x128xf32>
    %23 = arith.addf %21, %22 : vector<8x128xf32>
    %24 = arith.addf %14, %23 : vector<8x128xf32>
    %c2 = arith.constant 2 : index
    %c0_11 = arith.constant 0 : index
    %c0_12 = arith.constant 0 : index
    %25 = vector.load %arg2[%c2, %c0_11, %c0_12] : memref<4x128x128xbf16, #tpu.memory_space<vmem>>, vector<1x128x128xbf16>
    %26 = vector.shape_cast %25 : vector<1x128x128xbf16> to vector<128x128xbf16>
    %c2_i32 = arith.constant 2 : i32
    %27 = arith.addi %4, %c2_i32 : i32
    %28 = arith.index_cast %27 : i32 to index
    %c0_13 = arith.constant 0 : index
    %29 = vector.load %arg3[%28, %c0_13] : memref<8x128xf32, #tpu.memory_space<vmem>>, vector<1x128xf32>
    %30 = arith.truncf %24 : vector<8x128xf32> to vector<8x128xbf16>
    %cst_14 = arith.constant dense<0.000000e+00> : vector<8x128xf32>
    %31 = tpu.matmul %30, %26, %cst_14 {dimension_numbers = #tpu.dot_dimension_numbers<[1], [0], [0], [1], [0, 0, 1, 1], [], []>} : vector<8x128xbf16>, vector<128x128xbf16>, vector<8x128xf32> -> vector<8x128xf32>
    %32 = vector.broadcast %29 : vector<1x128xf32> to vector<8x128xf32>
    %33 = arith.addf %31, %32 : vector<8x128xf32>
    %34 = arith.addf %24, %33 : vector<8x128xf32>
    %c3 = arith.constant 3 : index
    %c0_15 = arith.constant 0 : index
    %c0_16 = arith.constant 0 : index
    %35 = vector.load %arg2[%c3, %c0_15, %c0_16] : memref<4x128x128xbf16, #tpu.memory_space<vmem>>, vector<1x128x128xbf16>
    %36 = vector.shape_cast %35 : vector<1x128x128xbf16> to vector<128x128xbf16>
    %c3_i32 = arith.constant 3 : i32
    %37 = arith.addi %4, %c3_i32 : i32
    %38 = arith.index_cast %37 : i32 to index
    %c0_17 = arith.constant 0 : index
    %39 = vector.load %arg3[%38, %c0_17] : memref<8x128xf32, #tpu.memory_space<vmem>>, vector<1x128xf32>
    %40 = arith.truncf %34 : vector<8x128xf32> to vector<8x128xbf16>
    %cst_18 = arith.constant dense<0.000000e+00> : vector<8x128xf32>
    %41 = tpu.matmul %40, %36, %cst_18 {dimension_numbers = #tpu.dot_dimension_numbers<[1], [0], [0], [1], [0, 0, 1, 1], [], []>} : vector<8x128xbf16>, vector<128x128xbf16>, vector<8x128xf32> -> vector<8x128xf32>
    %42 = vector.broadcast %39 : vector<1x128xf32> to vector<8x128xf32>
    %43 = arith.addf %41, %42 : vector<8x128xf32>
    %44 = arith.addf %34, %43 : vector<8x128xf32>
    %c0_19 = arith.constant 0 : index
    %c0_20 = arith.constant 0 : index
    %45 = vector.load %arg4[%c0_19, %c0_20] : memref<8x128xf32, #tpu.memory_space<vmem>>, vector<8x128xf32>
    tpu.vector_store %arg4[%c0_19, %c0_20], %44 {strides = array<i32>} : memref<8x128xf32, #tpu.memory_space<vmem>>, vector<8x128xf32>,
    return
  }
  func.func @transform_0(%arg0: i32) -> (i32, i32) {
    %c0_i32 = arith.constant 0 : i32
    %c0_i32_0 = arith.constant 0 : i32
    %c0_i32_1 = arith.constant 0 : i32
    return %c0_i32, %c0_i32_0 : i32, i32
  }
  func.func @transform_1(%arg0: i32) -> (i32, i32, i32) {
    %c0_i32 = arith.constant 0 : i32
    %c0_i32_0 = arith.constant 0 : i32
    %c0_i32_1 = arith.constant 0 : i32
    return %arg0, %c0_i32, %c0_i32_0 : i32, i32, i32
  }
  func.func @transform_2(%arg0: i32) -> (i32, i32) {
    %c0_i32 = arith.constant 0 : i32
    %c0_i32_0 = arith.constant 0 : i32
    %c0_i32_1 = arith.constant 0 : i32
    return %c0_i32, %c0_i32_0 : i32, i32
  }
  func.func @transform_3(%arg0: i32) -> (i32, i32) {
    %c0_i32 = arith.constant 0 : i32
    %c0_i32_0 = arith.constant 0 : i32
    %c0_i32_1 = arith.constant 0 : i32
    return %c0_i32, %c0_i32_0 : i32, i32
  }
}

</mosaic_0001>

<llo_original>
// kernel: resnet_forward.1
$region0: #{resnet_forward.1}
  #allocation0 [shape = 'u32[]', space=smem, size = 0x4, offset = 0x4, fixed_abs, tag = 'smem constant byte address 0x4 - core index']
  #allocation1 [shape = 'u32[144,128]{1,0:T(1,128)}', space=vmem, size = 0x12000, scoped, tag = 'internal scratch']
  %s0 = inlined_call_operand.vmem [shape: f32[8,128], index: 0, kind: input, shape index: {}]
  %s1 = inlined_call_operand.vmem [shape: bf16[8,128,128], index: 1, kind: input, shape index: {}]
  %s2 = inlined_call_operand.vmem [shape: f32[8,128], index: 2, kind: input, shape index: {}]
  %s3 = inlined_call_operand.hbm [shape: f32[8,128], index: 3, kind: output, shape index: {}]
  %s4 = sld [smem:[#allocation0]]
  $region49: #{resnet_forward.1} parent=0
    _
  %s6 = ssub.s32 1, %s4
  %s7 = scalar_select 0, %s6, %s4
  $region1: #{resnet_forward.1} parent=0
    #allocation2 [shape = 'u8[4096]{0}', space=vmem, size = 0x1000, scoped, tag = 'output window, operand 0, single buffered']
    #allocation3 [shape = 's32[2]{0}', space=sflag, size = 0x8, scoped, tag = 'scoped memory for resnet_forward.1']
    %8 = vsyncpa [#allocation3], 0
    loop: start=0, step=1, limit=4
    $region2: #{resnet_forward.1} parent=1 // loop_pre_header
      _
    $region3: #{resnet_forward.1} parent=1 // loop_header
      %s10 = sphi 0, %s14
      %p11 = scmp.ge.s32.totalorder %s10, 4
      %s18 = sphi 0, %s18
      %s20 = sphi 0, %s18
      %s21 = sphi 0, %s20
      %s35 = sphi 0, %s21
      %s41 = sphi 0, %s43
      %s44 = sphi 0, %s41
      %s45 = sphi 0, %s44
      %s61 = sphi 0, %s45
      %s65 = sphi 0, %s65
      %s67 = sphi 0, %s65
      %s68 = sphi 0, %s67
      %s82 = sphi 0, %s68
      %s86 = sphi 0, %s86
      %s88 = sphi 0, %s86
      %s89 = sphi 0, %s88
      %s103 = sphi 0, %s89
    $region4: #{resnet_forward.1} parent=1 // loop_header_branch
      %13 = sbr.rel (%p11) target = $region8
    $region5: #{resnet_forward.1} parent=1 // loop_body
      %s15 = ssub.s32 %s10, 1
      %s16 = ssub.s32 %s10, 2
      %s17 = sadd.s32 %s10, 1
      %s19 = sadd.s32 %s18, 1
      %p22 = scmp.eq.s32.totalorder %s10, 1
      %p23 = scmp.ne.s32.totalorder %s18, %s20
      %p24 = scmp.eq.s32.totalorder %s10, 0
      %p25 = por %p23, %p24
      %p26 = scmp.ne.s32.totalorder %s18, %s20
      %p27 = scmp.eq.s32.totalorder %s15, 1
      %p28 = por %p26, %p27
      %p29 = scmp.ne.s32.totalorder %s20, %s21
      %p30 = scmp.eq.s32.totalorder %s15, 0
      %p31 = por %p29, %p30
      %p32 = scmp.ne.s32.totalorder %s20, %s21
      %p33 = scmp.eq.s32.totalorder %s16, 1
      %p34 = por %p32, %p33
      %p36 = scmp.ne.s32.totalorder %s21, %s35
      %p37 = scmp.eq.s32.totalorder %s16, 0
      %p38 = por %p36, %p37
      %s39 = ssub.s32 %s10, %s17
      %p40 = scmp.eq.s32.totalorder %s39, 0
      %s42 = sadd.s32 %s41, 1
      %s43 = scalar_select %p40, %s41, %s42
      %p46 = pneg %p40
      %p47 = scmp.eq.s32.totalorder %s10, 1
      %p48 = por %p46, %p47
      %p49 = scmp.ne.s32.totalorder %s41, %s44
      %p50 = scmp.eq.s32.totalorder %s10, 0
      %p51 = por %p49, %p50
      %p52 = scmp.ne.s32.totalorder %s41, %s44
      %p53 = scmp.eq.s32.totalorder %s15, 1
      %p54 = por %p52, %p53
      %p55 = scmp.ne.s32.totalorder %s44, %s45
      %p56 = scmp.eq.s32.totalorder %s15, 0
      %p57 = por %p55, %p56
      %p58 = scmp.ne.s32.totalorder %s44, %s45
      %p59 = scmp.eq.s32.totalorder %s16, 1
      %p60 = por %p58, %p59
      %p62 = scmp.ne.s32.totalorder %s45, %s61
      %p63 = scmp.eq.s32.totalorder %s16, 0
      %p64 = por %p62, %p63
      %s66 = sadd.s32 %s65, 1
      %p69 = scmp.eq.s32.totalorder %s10, 1
      %p70 = scmp.ne.s32.totalorder %s65, %s67
      %p71 = scmp.eq.s32.totalorder %s10, 0
      %p72 = por %p70, %p71
      %p73 = scmp.ne.s32.totalorder %s65, %s67
      %p74 = scmp.eq.s32.totalorder %s15, 1
      %p75 = por %p73, %p74
      %p76 = scmp.ne.s32.totalorder %s67, %s68
      %p77 = scmp.eq.s32.totalorder %s15, 0
      %p78 = por %p76, %p77
      %p79 = scmp.ne.s32.totalorder %s67, %s68
      %p80 = scmp.eq.s32.totalorder %s16, 1
      %p81 = por %p79, %p80
      %p83 = scmp.ne.s32.totalorder %s68, %s82
      %p84 = scmp.eq.s32.totalorder %s16, 0
      %p85 = por %p83, %p84
      %s87 = sadd.s32 %s86, 1
      %p90 = scmp.eq.s32.totalorder %s10, 1
      %p91 = scmp.ne.s32.totalorder %s86, %s88
      %p92 = scmp.eq.s32.totalorder %s10, 0
      %p93 = por %p91, %p92
      %p94 = scmp.ne.s32.totalorder %s86, %s88
      %p95 = scmp.eq.s32.totalorder %s15, 1
      %p96 = por %p94, %p95
      %p97 = scmp.ne.s32.totalorder %s88, %s89
      %p98 = scmp.eq.s32.totalorder %s15, 0
      %p99 = por %p97, %p98
      %p100 = scmp.ne.s32.totalorder %s88, %s89
      %p101 = scmp.eq.s32.totalorder %s16, 1
      %p102 = por %p100, %p101
      %p104 = scmp.ne.s32.totalorder %s89, %s103
      %p105 = scmp.eq.s32.totalorder %s16, 0
      %p106 = por %p104, %p105
      %p107 = scmp.le.s32.totalorder 1, %s10
      %p108 = scmp.lt.s32.totalorder %s10, 3
      %p109 = pnand %p107, %p108
      %p110 = pneg %p109
      // Predicated region
      $region9: #{resnet_forward.1} parent=5 // pred_check
        _
      $region10: #{resnet_forward.1} parent=5 // pred_check_branch
        %112 = sbr.rel (%p109) target = $region12
      $region11: #{resnet_forward.1} parent=5 // pred_region
        %s113 = ssub.s32 %s10, 1
        // Predicated region
        $region13: #{resnet_forward.1} parent=11 // pred_check
          %p114 = pneg %p31
        $region14: #{resnet_forward.1} parent=11 // pred_check_branch
          %116 = sbr.rel (%p114) target = $region16
        $region15: #{resnet_forward.1} parent=11 // pred_region
          _
        $region16: #{resnet_forward.1} parent=11 // pred_fallthru
          _
        // Predicated region
        $region17: #{resnet_forward.1} parent=11 // pred_check
          %p117 = pneg %p78
        $region18: #{resnet_forward.1} parent=11 // pred_check_branch
          %119 = sbr.rel (%p117) target = $region20
        $region19: #{resnet_forward.1} parent=11 // pred_region
          _
        $region20: #{resnet_forward.1} parent=11 // pred_fallthru
          _
      $region12: #{resnet_forward.1} parent=5 // pred_fallthru
        _
      %p120 = scmp.lt.s32.totalorder %s10, 2
      // Predicated region
      $region21: #{resnet_forward.1} parent=5 // pred_check
        %p121 = pneg %p120
      $region22: #{resnet_forward.1} parent=5 // pred_check_branch
        %123 = sbr.rel (%p121) target = $region24
      $region23: #{resnet_forward.1} parent=5 // pred_region
        // Predicated region
        $region25: #{resnet_forward.1} parent=23 // pred_check
          %p124 = pneg %p51
        $region26: #{resnet_forward.1} parent=23 // pred_check_branch
          %126 = sbr.rel (%p124) target = $region28
        $region27: #{resnet_forward.1} parent=23 // pred_region
          %s127 = smul.u32 4, %s10
          %p128 = scmp.lt.s32.totalorder %s127, 7
          %s129 = scalar_select %p128, %s127, 7
          %s130 = smul.addr %s129, 16
          %s131 = smul.addr %s130, 4
          %s132 = scalar_lea.vmem %s1, %s131
          %s133 = smul.u32 4, %s10
        $region28: #{resnet_forward.1} parent=23 // pred_fallthru
          _
      $region24: #{resnet_forward.1} parent=5 // pred_fallthru
        _
      %p134 = scmp.le.s32.totalorder 1, %s10
      %p135 = scmp.lt.s32.totalorder %s10, 3
      %p136 = pnand %p134, %p135
      %p137 = pneg %p136
      // Predicated region
      $region29: #{resnet_forward.1} parent=5 // pred_check
        _
      $region30: #{resnet_forward.1} parent=5 // pred_check_branch
        %139 = sbr.rel (%p136) target = $region32
      $region31: #{resnet_forward.1} parent=5 // pred_region
        %s140 = ssub.s32 %s10, 1
        %p141 = pneg %p31
        %p142 = pneg %p28
        %s143 = smul.u32 4, %s15
        %p144 = scmp.lt.s32.totalorder %s143, 7
        %s145 = scalar_select %p144, %s143, 7
        %s146 = smul.addr %s145, 16
        %s147 = smul.addr %s146, 4
        %s148 = scalar_lea.vmem %s1, %s147
        %p149 = pneg %p57
        %p150 = pneg %p54
        %p151 = pneg %p78
        %p152 = pneg %p75
        %p153 = pneg %p99
        %p154 = pneg %p96
        %s155 = smul.u32 4, %s15
        %p156 = scmp.lt.s32.totalorder %s155, 7
        %s157 = scalar_select %p156, %s155, 7
        %s158 = smul.addr %s157, 16
        %s159 = smul.addr %s158, 4
        %s160 = scalar_lea.vmem %s1, %s159
        %s161 = smul.u32 4, %s15
        %p163 = scmp.eq.s32.totalorder %s15, 0
        // Predicated region
        $region33: #{resnet_forward.1} parent=31 // pred_check
          %p164 = pneg %p163
        $region34: #{resnet_forward.1} parent=31 // pred_check_branch
          %166 = sbr.rel (%p164) target = $region36
        $region35: #{resnet_forward.1} parent=31 // pred_region
          %v167 = vld [vmem:[%s0] sm:$0xff]
          %168 = vst [vmem:[#allocation2] sm:$0xff] %v167
        $region36: #{resnet_forward.1} parent=31 // pred_fallthru
          _
        %v169 = vld [vmem:[#allocation2] sm:$0xff]
        %s170 = smul.u32 %s15, 4
        %v171 = vld [vmem:[%s160] sm:$0xf]
        %v172 = vld [vmem:[%s160 + $0x4] sm:$0xf]
        %v173 = vld [vmem:[%s160 + $0x8] sm:$0xf]
        %v174 = vld [vmem:[%s160 + $0xc] sm:$0xf]
        %v175 = vld [vmem:[%s160 + $0x10] sm:$0xf]
        %v176 = vld [vmem:[%s160 + $0x14] sm:$0xf]
        %v177 = vld [vmem:[%s160 + $0x18] sm:$0xf]
        %v178 = vld [vmem:[%s160 + $0x1c] sm:$0xf]
        %v179 = vld [vmem:[%s160 + $0x20] sm:$0xf]
        %v180 = vld [vmem:[%s160 + $0x24] sm:$0xf]
        %v181 = vld [vmem:[%s160 + $0x28] sm:$0xf]
        %v182 = vld [vmem:[%s160 + $0x2c] sm:$0xf]
        %v183 = vld [vmem:[%s160 + $0x30] sm:$0xf]
        %v184 = vld [vmem:[%s160 + $0x34] sm:$0xf]
        %v185 = vld [vmem:[%s160 + $0x38] sm:$0xf]
        %v186 = vld [vmem:[%s160 + $0x3c] sm:$0xf]
        %s187 = scalar_lea.vmem %s2, %s170
        %v188 = vld [vmem:[%s187] sm:$0x1]
        %v189 = vpack.c.bf16 %v169, %v169
        %v190 = vlaneseq
        %v191 = vshrl.u32 %v190, 7
        %v192 = vsub.s32 0, %v191
        %v193 = vrot.slane %v188, %v192
        %v210 = vunpack.c.l.b16 %v171
        %v211 = vunpack.c.l.b16 %v172
        %v212 = vunpack.c.l.b16 %v173
        %v213 = vunpack.c.l.b16 %v174
        %v214 = vunpack.c.l.b16 %v175
        %v215 = vunpack.c.l.b16 %v176
        %v216 = vunpack.c.l.b16 %v177
        %v217 = vunpack.c.l.b16 %v178
        %v218 = vunpack.c.l.b16 %v179
        %v219 = vunpack.c.l.b16 %v180
        %v220 = vunpack.c.l.b16 %v181
        %v221 = vunpack.c.l.b16 %v182
        %v222 = vunpack.c.l.b16 %v183
        %v223 = vunpack.c.l.b16 %v184
        %v224 = vunpack.c.l.b16 %v185
        %v225 = vunpack.c.l.b16 %v186
        %v226 = vpack.c.b16 %v211, %v210
        %v227 = vpack.c.b16 %v213, %v212
        %v228 = vpack.c.b16 %v215, %v214
        %v229 = vpack.c.b16 %v217, %v216
        %v230 = vpack.c.b16 %v219, %v218
        %v231 = vpack.c.b16 %v221, %v220
        %v232 = vpack.c.b16 %v223, %v222
        %v233 = vpack.c.b16 %v225, %v224
        %242 = vmatprep.subr.bf16.mxu0 0
        %243 = vmatpush1.bf16.msra.mxu0 %v226
        %244 = vmatprep.subr.bf16.mxu0 0
        %245 = vmatpush1.bf16.msra.mxu0 %v227
        %246 = vmatprep.subr.bf16.mxu0 0
        %247 = vmatpush1.bf16.msra.mxu0 %v228
        %248 = vmatprep.subr.bf16.mxu0 0
        %249 = vmatpush1.bf16.msra.mxu0 %v229
        %250 = vmatprep.subr.bf16.mxu0 0
        %251 = vmatpush1.bf16.msra.mxu0 %v230
        %252 = vmatprep.subr.bf16.mxu0 0
        %253 = vmatpush1.bf16.msra.mxu0 %v231
        %254 = vmatprep.subr.bf16.mxu0 0
        %255 = vmatpush1.bf16.msra.mxu0 %v232
        %256 = vmatprep.subr.bf16.mxu0 0
        %257 = vmatpush1.bf16.msra.mxu0 %v233
        %258 = vmatprep.subr.bf16.mxu0 0
        %259 = vmatpush1.bf16.msra.mxu0 0
        %260 = vmatprep.subr.bf16.mxu0 0
        %261 = vmatpush1.bf16.msra.mxu0 0
        %262 = vmatprep.subr.bf16.mxu0 0
        %263 = vmatpush1.bf16.msra.mxu0 0
        %264 = vmatprep.subr.bf16.mxu0 0
        %265 = vmatpush1.bf16.msra.mxu0 0
        %266 = vmatprep.subr.bf16.mxu0 0
        %267 = vmatpush1.bf16.msra.mxu0 0
        %268 = vmatprep.subr.bf16.mxu0 0
        %269 = vmatpush1.bf16.msra.mxu0 0
        %270 = vmatprep.subr.bf16.mxu0 0
        %271 = vmatpush1.bf16.msra.mxu0 0
        %272 = vmatprep.subr.bf16.mxu0 0
        %273 = vmatpush1.bf16.msra.mxu0 0
        %274 = vmatprep.mubr.bf16.mxu0 0
        %275 = vmatmul.mubr.bf16.gmra.mrb[0].mxu0 %v189
        %v276 = vpop.f32.mrb[0].mxu0
        %v277 = vadd.f32 %v193, %v276
        %v278 = vpop.f32.mrb[0].mxu0
        %v279 = vpop.f32.mrb[0].mxu0
        %v280 = vpop.f32.mrb[0].mxu0
        %281 = vdwg.mxu0
        %v282 = vadd.f32 %v169, %v277
        %s283 = scalar_lea.vmem %s160, 64
        %v284 = vld [vmem:[%s283] sm:$0xf]
        %v285 = vld [vmem:[%s283 + $0x4] sm:$0xf]
        %v286 = vld [vmem:[%s283 + $0x8] sm:$0xf]
        %v287 = vld [vmem:[%s283 + $0xc] sm:$0xf]
        %v288 = vld [vmem:[%s283 + $0x10] sm:$0xf]
        %v289 = vld [vmem:[%s283 + $0x14] sm:$0xf]
        %v290 = vld [vmem:[%s283 + $0x18] sm:$0xf]
        %v291 = vld [vmem:[%s283 + $0x1c] sm:$0xf]
        %v292 = vld [vmem:[%s283 + $0x20] sm:$0xf]
        %v293 = vld [vmem:[%s283 + $0x24] sm:$0xf]
        %v294 = vld [vmem:[%s283 + $0x28] sm:$0xf]
        %v295 = vld [vmem:[%s283 + $0x2c] sm:$0xf]
        %v296 = vld [vmem:[%s283 + $0x30] sm:$0xf]
        %v297 = vld [vmem:[%s283 + $0x34] sm:$0xf]
        %v298 = vld [vmem:[%s283 + $0x38] sm:$0xf]
        %v299 = vld [vmem:[%s283 + $0x3c] sm:$0xf]
        %s300 = sadd.s32 %s170, 1
        %s301 = scalar_lea.vmem %s2, %s300
        %v302 = vld [vmem:[%s301] sm:$0x1]
        %v303 = vpack.c.bf16 %v282, %v282
        %v304 = vlaneseq
        %v305 = vshrl.u32 %v304, 7
        %v306 = vsub.s32 0, %v305
        %v307 = vrot.slane %v302, %v306
        %v324 = vunpack.c.l.b16 %v284
        %v325 = vunpack.c.l.b16 %v285
        %v326 = vunpack.c.l.b16 %v286
        %v327 = vunpack.c.l.b16 %v287
        %v328 = vunpack.c.l.b16 %v288
        %v329 = vunpack.c.l.b16 %v289
        %v330 = vunpack.c.l.b16 %v290
        %v331 = vunpack.c.l.b16 %v291
        %v332 = vunpack.c.l.b16 %v292
        %v333 = vunpack.c.l.b16 %v293
        %v334 = vunpack.c.l.b16 %v294
        %v335 = vunpack.c.l.b16 %v295
        %v336 = vunpack.c.l.b16 %v296
        %v337 = vunpack.c.l.b16 %v297
        %v338 = vunpack.c.l.b16 %v298
        %v339 = vunpack.c.l.b16 %v299
        %v340 = vpack.c.b16 %v325, %v324
        %v341 = vpack.c.b16 %v327, %v326
        %v342 = vpack.c.b16 %v329, %v328
        %v343 = vpack.c.b16 %v331, %v330
        %v344 = vpack.c.b16 %v333, %v332
        %v345 = vpack.c.b16 %v335, %v334
        %v346 = vpack.c.b16 %v337, %v336
        %v347 = vpack.c.b16 %v339, %v338
        %356 = vmatprep.subr.bf16.mxu0 0
        %357 = vmatpush1.bf16.msra.mxu0 %v340
        %358 = vmatprep.subr.bf16.mxu0 0
        %359 = vmatpush1.bf16.msra.mxu0 %v341
        %360 = vmatprep.subr.bf16.mxu0 0
        %361 = vmatpush1.bf16.msra.mxu0 %v342
        %362 = vmatprep.subr.bf16.mxu0 0
        %363 = vmatpush1.bf16.msra.mxu0 %v343
        %364 = vmatprep.subr.bf16.mxu0 0
        %365 = vmatpush1.bf16.msra.mxu0 %v344
        %366 = vmatprep.subr.bf16.mxu0 0
        %367 = vmatpush1.bf16.msra.mxu0 %v345
        %368 = vmatprep.subr.bf16.mxu0 0
        %369 = vmatpush1.bf16.msra.mxu0 %v346
        %370 = vmatprep.subr.bf16.mxu0 0
        %371 = vmatpush1.bf16.msra.mxu0 %v347
        %372 = vmatprep.subr.bf16.mxu0 0
        %373 = vmatpush1.bf16.msra.mxu0 0
        %374 = vmatprep.subr.bf16.mxu0 0
        %375 = vmatpush1.bf16.msra.mxu0 0
        %376 = vmatprep.subr.bf16.mxu0 0
        %377 = vmatpush1.bf16.msra.mxu0 0
        %378 = vmatprep.subr.bf16.mxu0 0
        %379 = vmatpush1.bf16.msra.mxu0 0
        %380 = vmatprep.subr.bf16.mxu0 0
        %381 = vmatpush1.bf16.msra.mxu0 0
        %382 = vmatprep.subr.bf16.mxu0 0
        %383 = vmatpush1.bf16.msra.mxu0 0
        %384 = vmatprep.subr.bf16.mxu0 0
        %385 = vmatpush1.bf16.msra.mxu0 0
        %386 = vmatprep.subr.bf16.mxu0 0
        %387 = vmatpush1.bf16.msra.mxu0 0
        %388 = vmatprep.mubr.bf16.mxu0 0
        %389 = vmatmul.mubr.bf16.gmra.mrb[0].mxu0 %v303
        %v390 = vpop.f32.mrb[0].mxu0
        %v391 = vadd.f32 %v307, %v390
        %v392 = vpop.f32.mrb[0].mxu0
        %v393 = vpop.f32.mrb[0].mxu0
        %v394 = vpop.f32.mrb[0].mxu0
        %395 = vdwg.mxu0
        %v396 = vadd.f32 %v282, %v391
        %s397 = scalar_lea.vmem %s160, 128
        %v398 = vld [vmem:[%s397] sm:$0xf]
        %v399 = vld [vmem:[%s397 + $0x4] sm:$0xf]
        %v400 = vld [vmem:[%s397 + $0x8] sm:$0xf]
        %v401 = vld [vmem:[%s397 + $0xc] sm:$0xf]
        %v402 = vld [vmem:[%s397 + $0x10] sm:$0xf]
        %v403 = vld [vmem:[%s397 + $0x14] sm:$0xf]
        %v404 = vld [vmem:[%s397 + $0x18] sm:$0xf]
        %v405 = vld [vmem:[%s397 + $0x1c] sm:$0xf]
        %v406 = vld [vmem:[%s397 + $0x20] sm:$0xf]
        %v407 = vld [vmem:[%s397 + $0x24] sm:$0xf]
        %v408 = vld [vmem:[%s397 + $0x28] sm:$0xf]
        %v409 = vld [vmem:[%s397 + $0x2c] sm:$0xf]
        %v410 = vld [vmem:[%s397 + $0x30] sm:$0xf]
        %v411 = vld [vmem:[%s397 + $0x34] sm:$0xf]
        %v412 = vld [vmem:[%s397 + $0x38] sm:$0xf]
        %v413 = vld [vmem:[%s397 + $0x3c] sm:$0xf]
        %s414 = sadd.s32 %s170, 2
        %s415 = scalar_lea.vmem %s2, %s414
        %v416 = vld [vmem:[%s415] sm:$0x1]
        %v417 = vpack.c.bf16 %v396, %v396
        %v418 = vlaneseq
        %v419 = vshrl.u32 %v418, 7
        %v420 = vsub.s32 0, %v419
        %v421 = vrot.slane %v416, %v420
        %v438 = vunpack.c.l.b16 %v398
        %v439 = vunpack.c.l.b16 %v399
        %v440 = vunpack.c.l.b16 %v400
        %v441 = vunpack.c.l.b16 %v401
        %v442 = vunpack.c.l.b16 %v402
        %v443 = vunpack.c.l.b16 %v403
        %v444 = vunpack.c.l.b16 %v404
        %v445 = vunpack.c.l.b16 %v405
        %v446 = vunpack.c.l.b16 %v406
        %v447 = vunpack.c.l.b16 %v407
        %v448 = vunpack.c.l.b16 %v408
        %v449 = vunpack.c.l.b16 %v409
        %v450 = vunpack.c.l.b16 %v410
        %v451 = vunpack.c.l.b16 %v411
        %v452 = vunpack.c.l.b16 %v412
        %v453 = vunpack.c.l.b16 %v413
        %v454 = vpack.c.b16 %v439, %v438
        %v455 = vpack.c.b16 %v441, %v440
        %v456 = vpack.c.b16 %v443, %v442
        %v457 = vpack.c.b16 %v445, %v444
        %v458 = vpack.c.b16 %v447, %v446
        %v459 = vpack.c.b16 %v449, %v448
        %v460 = vpack.c.b16 %v451, %v450
        %v461 = vpack.c.b16 %v453, %v452
        %470 = vmatprep.subr.bf16.mxu0 0
        %471 = vmatpush1.bf16.msra.mxu0 %v454
        %472 = vmatprep.subr.bf16.mxu0 0
        %473 = vmatpush1.bf16.msra.mxu0 %v455
        %474 = vmatprep.subr.bf16.mxu0 0
        %475 = vmatpush1.bf16.msra.mxu0 %v456
        %476 = vmatprep.subr.bf16.mxu0 0
        %477 = vmatpush1.bf16.msra.mxu0 %v457
        %478 = vmatprep.subr.bf16.mxu0 0
        %479 = vmatpush1.bf16.msra.mxu0 %v458
        %480 = vmatprep.subr.bf16.mxu0 0
        %481 = vmatpush1.bf16.msra.mxu0 %v459
        %482 = vmatprep.subr.bf16.mxu0 0
        %483 = vmatpush1.bf16.msra.mxu0 %v460
        %484 = vmatprep.subr.bf16.mxu0 0
        %485 = vmatpush1.bf16.msra.mxu0 %v461
        %486 = vmatprep.subr.bf16.mxu0 0
        %487 = vmatpush1.bf16.msra.mxu0 0
        %488 = vmatprep.subr.bf16.mxu0 0
        %489 = vmatpush1.bf16.msra.mxu0 0
        %490 = vmatprep.subr.bf16.mxu0 0
        %491 = vmatpush1.bf16.msra.mxu0 0
        %492 = vmatprep.subr.bf16.mxu0 0
        %493 = vmatpush1.bf16.msra.mxu0 0
        %494 = vmatprep.subr.bf16.mxu0 0
        %495 = vmatpush1.bf16.msra.mxu0 0
        %496 = vmatprep.subr.bf16.mxu0 0
        %497 = vmatpush1.bf16.msra.mxu0 0
        %498 = vmatprep.subr.bf16.mxu0 0
        %499 = vmatpush1.bf16.msra.mxu0 0
        %500 = vmatprep.subr.bf16.mxu0 0
        %501 = vmatpush1.bf16.msra.mxu0 0
        %502 = vmatprep.mubr.bf16.mxu0 0
        %503 = vmatmul.mubr.bf16.gmra.mrb[0].mxu0 %v417
        %v504 = vpop.f32.mrb[0].mxu0
        %v505 = vadd.f32 %v421, %v504
        %v506 = vpop.f32.mrb[0].mxu0
        %v507 = vpop.f32.mrb[0].mxu0
        %v508 = vpop.f32.mrb[0].mxu0
        %509 = vdwg.mxu0
        %v510 = vadd.f32 %v396, %v505
        %s511 = scalar_lea.vmem %s160, 192
        %v512 = vld [vmem:[%s511] sm:$0xf]
        %v513 = vld [vmem:[%s511 + $0x4] sm:$0xf]
        %v514 = vld [vmem:[%s511 + $0x8] sm:$0xf]
        %v515 = vld [vmem:[%s511 + $0xc] sm:$0xf]
        %v516 = vld [vmem:[%s511 + $0x10] sm:$0xf]
        %v517 = vld [vmem:[%s511 + $0x14] sm:$0xf]
        %v518 = vld [vmem:[%s511 + $0x18] sm:$0xf]
        %v519 = vld [vmem:[%s511 + $0x1c] sm:$0xf]
        %v520 = vld [vmem:[%s511 + $0x20] sm:$0xf]
        %v521 = vld [vmem:[%s511 + $0x24] sm:$0xf]
        %v522 = vld [vmem:[%s511 + $0x28] sm:$0xf]
        %v523 = vld [vmem:[%s511 + $0x2c] sm:$0xf]
        %v524 = vld [vmem:[%s511 + $0x30] sm:$0xf]
        %v525 = vld [vmem:[%s511 + $0x34] sm:$0xf]
        %v526 = vld [vmem:[%s511 + $0x38] sm:$0xf]
        %v527 = vld [vmem:[%s511 + $0x3c] sm:$0xf]
        %s528 = sadd.s32 %s170, 3
        %s529 = scalar_lea.vmem %s2, %s528
        %v530 = vld [vmem:[%s529] sm:$0x1]
        %v531 = vpack.c.bf16 %v510, %v510
        %v532 = vlaneseq
        %v533 = vshrl.u32 %v532, 7
        %v534 = vsub.s32 0, %v533
        %v535 = vrot.slane %v530, %v534
        %v552 = vunpack.c.l.b16 %v512
        %v553 = vunpack.c.l.b16 %v513
        %v554 = vunpack.c.l.b16 %v514
        %v555 = vunpack.c.l.b16 %v515
        %v556 = vunpack.c.l.b16 %v516
        %v557 = vunpack.c.l.b16 %v517
        %v558 = vunpack.c.l.b16 %v518
        %v559 = vunpack.c.l.b16 %v519
        %v560 = vunpack.c.l.b16 %v520
        %v561 = vunpack.c.l.b16 %v521
        %v562 = vunpack.c.l.b16 %v522
        %v563 = vunpack.c.l.b16 %v523
        %v564 = vunpack.c.l.b16 %v524
        %v565 = vunpack.c.l.b16 %v525
        %v566 = vunpack.c.l.b16 %v526
        %v567 = vunpack.c.l.b16 %v527
        %v568 = vpack.c.b16 %v553, %v552
        %v569 = vpack.c.b16 %v555, %v554
        %v570 = vpack.c.b16 %v557, %v556
        %v571 = vpack.c.b16 %v559, %v558
        %v572 = vpack.c.b16 %v561, %v560
        %v573 = vpack.c.b16 %v563, %v562
        %v574 = vpack.c.b16 %v565, %v564
        %v575 = vpack.c.b16 %v567, %v566
        %584 = vmatprep.subr.bf16.mxu0 0
        %585 = vmatpush1.bf16.msra.mxu0 %v568
        %586 = vmatprep.subr.bf16.mxu0 0
        %587 = vmatpush1.bf16.msra.mxu0 %v569
        %588 = vmatprep.subr.bf16.mxu0 0
        %589 = vmatpush1.bf16.msra.mxu0 %v570
        %590 = vmatprep.subr.bf16.mxu0 0
        %591 = vmatpush1.bf16.msra.mxu0 %v571
        %592 = vmatprep.subr.bf16.mxu0 0
        %593 = vmatpush1.bf16.msra.mxu0 %v572
        %594 = vmatprep.subr.bf16.mxu0 0
        %595 = vmatpush1.bf16.msra.mxu0 %v573
        %596 = vmatprep.subr.bf16.mxu0 0
        %597 = vmatpush1.bf16.msra.mxu0 %v574
        %598 = vmatprep.subr.bf16.mxu0 0
        %599 = vmatpush1.bf16.msra.mxu0 %v575
        %600 = vmatprep.subr.bf16.mxu0 0
        %601 = vmatpush1.bf16.msra.mxu0 0
        %602 = vmatprep.subr.bf16.mxu0 0
        %603 = vmatpush1.bf16.msra.mxu0 0
        %604 = vmatprep.subr.bf16.mxu0 0
        %605 = vmatpush1.bf16.msra.mxu0 0
        %606 = vmatprep.subr.bf16.mxu0 0
        %607 = vmatpush1.bf16.msra.mxu0 0
        %608 = vmatprep.subr.bf16.mxu0 0
        %609 = vmatpush1.bf16.msra.mxu0 0
        %610 = vmatprep.subr.bf16.mxu0 0
        %611 = vmatpush1.bf16.msra.mxu0 0
        %612 = vmatprep.subr.bf16.mxu0 0
        %613 = vmatpush1.bf16.msra.mxu0 0
        %614 = vmatprep.subr.bf16.mxu0 0
        %615 = vmatpush1.bf16.msra.mxu0 0
        %616 = vmatprep.mubr.bf16.mxu0 0
        %617 = vmatmul.mubr.bf16.gmra.mrb[0].mxu0 %v531
        %v618 = vpop.f32.mrb[0].mxu0
        %v619 = vadd.f32 %v535, %v618
        %v620 = vpop.f32.mrb[0].mxu0
        %v621 = vpop.f32.mrb[0].mxu0
        %v622 = vpop.f32.mrb[0].mxu0
        %623 = vdwg.mxu0
        %v624 = vadd.f32 %v510, %v619
        %625 = vst [vmem:[#allocation2] sm:$0xff] %v624
        // Predicated region
        $region37: #{resnet_forward.1} parent=31 // pred_check
          %p626 = pneg %p96
        $region38: #{resnet_forward.1} parent=31 // pred_check_branch
          %628 = sbr.rel (%p626) target = $region40
        $region39: #{resnet_forward.1} parent=31 // pred_region
          %s630 = ssub.s32 128, 128
          %631 = vsyncadd [#allocation3], %s630
          %s633 = sshll.u32 [#allocation2], 4
          %s634 = int_to_ptr.vmem [resolvable:$true] %s633
          %636 = dma.vmem_to_hbm [thread:$0]  %s634, 128, %s3, [#allocation3]
        $region40: #{resnet_forward.1} parent=31 // pred_fallthru
          _
        // Predicated region
        $region41: #{resnet_forward.1} parent=31 // pred_check
          %p637 = pneg %p96
        $region42: #{resnet_forward.1} parent=31 // pred_check_branch
          %639 = sbr.rel (%p637) target = $region44
        $region43: #{resnet_forward.1} parent=31 // pred_region
          %640 = dma.done [#allocation3], 128
        $region44: #{resnet_forward.1} parent=31 // pred_fallthru
          _
      $region32: #{resnet_forward.1} parent=5 // pred_fallthru
        _
      %p641 = scmp.le.s32.totalorder 2, %s10
      // Predicated region
      $region45: #{resnet_forward.1} parent=5 // pred_check
        %p642 = pneg %p641
      $region46: #{resnet_forward.1} parent=5 // pred_check_branch
        %644 = sbr.rel (%p642) target = $region48
      $region47: #{resnet_forward.1} parent=5 // pred_region
        %s645 = ssub.s32 %s10, 2
      $region48: #{resnet_forward.1} parent=5 // pred_fallthru
        _
    $region6: #{resnet_forward.1} parent=1 // loop_footer
      %s14 = sadd.s32 1, %s10
    $region7: #{resnet_forward.1} parent=1 // loop_footer_branch
      %9 = sbr.rel target = $region3
    $region8: #{resnet_forward.1} parent=1 // loop_exit
      _
    %646 = vsyncpa [#allocation3], 1
    %s647 = scalar_lea.sflag [#allocation3], 1
    %648 = vsyncpa %s647, 1

</llo_original>
